<compile_context>
chip_gen: v7x
topology: tpu7x:2x2x1
jax: 0.10.0
libtpu: 0.0.40
codegen_flags: <defaults>
</compile_context>

<pallas_src>
import jax
import jax.numpy as jnp
from jax.experimental import pallas as pl
from jax.experimental.pallas import tpu as pltpu  # noqa: F401  (TPU backend plumbing)


class BaseNetConfig:
    def __init__(self, num_channels: int = 256, dropout: float = 0.3,
                 linear_hidden=(256, 128)):
        self.num_channels = num_channels
        self.linear_hidden = list(linear_hidden)
        self.dropout = dropout


# ----------------------------------------------------------------------------
# Standalone Pallas identity kernel (harness demo only; NOT used by forward).
# ----------------------------------------------------------------------------
def _copy_kernel(s_ref, o_ref):
    # Single full-array VMEM tile: one vector load + one full-width store.
    o_ref[...] = s_ref[...]


def pallas_identity(x: jnp.ndarray) -> jnp.ndarray:
    """Lane-dense, single-block identity copy through Pallas.

    Accepts (B, H, W); internally flattens to (B, H*W) so the trailing dim is
    a multiple of 128 (lane-dense), runs one gridless pallas_call (whole array
    as a single VMEM block, input aliased to output), and reshapes back.
    """
    B, H, W = x.shape
    x2d = x.reshape(B, H * W)  # (2, 256): last dim is a multiple of 128

    out2d = pl.pallas_call(
        _copy_kernel,
        out_shape=jax.ShapeDtypeStruct(x2d.shape, x2d.dtype),
        # Gridless: whole array is one block -> one DMA in, one DMA out.
        in_specs=[pl.BlockSpec(x2d.shape, lambda: (0, 0))],
        out_specs=pl.BlockSpec(x2d.shape, lambda: (0, 0)),
        # The "copy" aliases the input buffer: no second HBM writeback buffer.
        input_output_aliases={0: 0},
    )(x2d)

    return out2d.reshape(B, H, W)


# ----------------------------------------------------------------------------
# MyNet: exact port of the PyTorch stub.
# ----------------------------------------------------------------------------
class MyNet:
    """JAX/Pallas port of the PyTorch MyNet stub."""

    def __init__(self, observation_size, action_space_size, config: BaseNetConfig):
        self.observation_size = observation_size
        self.action_space_size = action_space_size
        self.config = config
        # No parameters: the reference __init__ creates no layers.

    def forward(self, s: jnp.ndarray):
        # Zero-cost forward: no device work, no sync — exactly matches the
        # PyTorch semantics of returning (None, None) while ignoring `s`.
        del s
        return (None, None)

    __call__ = forward


if __name__ == "__main__":
    key = jax.random.PRNGKey(0)
    obs_h, obs_w = 16, 16
    batch = 2

    config = BaseNetConfig(num_channels=256, dropout=0.3, linear_hidden=[256, 128])
    net = MyNet(observation_size=(obs_h, obs_w), action_space_size=4, config=config)

    s = jax.random.normal(key, (batch, obs_h, obs_w), dtype=jnp.float32)

    # 1) Module contract: forward is a no-op returning (None, None).
    pi, v = net(s)
    assert pi is None and v is None, "forward must return (None, None)"

    # 2) Harness requirement: run the Pallas kernel once and block on it.
    out = pallas_identity(s)
    out = jax.block_until_ready(out)
    assert out.shape == s.shape and out.dtype == s.dtype
    # Identity check against the (non-donated) original observation tensor.
    assert bool(jnp.all(out == s)), "Pallas identity copy mismatch"

    print("KERNEL_OK")
</pallas_src>

<mosaic_0001>
module attributes {stable_mosaic.version = 11 : i64} {
  func.func @_copy_kernel(%arg0: memref<2x256xf32, #tpu.memory_space<vmem>>, %arg1: memref<2x256xf32, #tpu.memory_space<vmem>>) attributes {dimension_semantics = [], scalar_prefetch = 0 : i64, scratch_operands = 0 : i64, tpu.core_type = #tpu.core_type<tc>} {
    %c0 = arith.constant 0 : index
    %c0_0 = arith.constant 0 : index
    %0 = vector.load %arg0[%c0, %c0_0] : memref<2x256xf32, #tpu.memory_space<vmem>>, vector<2x256xf32>
    %c0_1 = arith.constant 0 : index
    %c0_2 = arith.constant 0 : index
    %1 = vector.load %arg1[%c0_1, %c0_2] : memref<2x256xf32, #tpu.memory_space<vmem>>, vector<2x256xf32>
    tpu.vector_store %arg1[%c0_1, %c0_2], %0 {strides = array<i32>} : memref<2x256xf32, #tpu.memory_space<vmem>>, vector<2x256xf32>,
    return
  }
}

</mosaic_0001>

<llo_original>
// kernel: tpu_custom_call.1
$region0: #{tpu_custom_call.1}
  #allocation0 [shape = 'u32[]', space=smem, size = 0x4, offset = 0x4, fixed_abs, tag = 'smem constant byte address 0x4 - core index']
  #allocation1 [shape = 'u32[144,128]{1,0:T(1,128)}', space=vmem, size = 0x12000, scoped, tag = 'internal scratch']
  %s0 = inlined_call_operand.hbm [shape: f32[2,256], index: 0, kind: input, shape index: {}, may-alias: {0,1}]
  %s1 = inlined_call_operand.hbm [shape: f32[2,256], index: 1, kind: output, shape index: {}, may-alias: {0,1}]
  %s2 = sld [smem:[#allocation0]]
  $region18: #{tpu_custom_call.1} parent=0
    _
  %s4 = ssub.s32 1, %s2
  %s5 = scalar_select 0, %s4, %s2
  $region1: #{tpu_custom_call.1} parent=0
    #allocation2 [shape = 'u8[2048]{0}', space=vmem, size = 0x800, scoped, tag = 'input window, operand 0, single buffered']
    #allocation3 [shape = 's32[1]{0}', space=sflag, size = 0x4, scoped, tag = 'scoped memory for tpu_custom_call.1']
    #allocation4 [shape = 's32[1]{0}', space=sflag, size = 0x4, scoped, tag = 'scoped memory for tpu_custom_call.1']
    #allocation5 [shape = 'u8[2048]{0}', space=vmem, size = 0x800, scoped, tag = 'output window, operand 0, single buffered']
    %6 = vsyncpa [#allocation3], 0
    %7 = vsyncpa [#allocation4], 0
    // Predicated region
    $region2: #{tpu_custom_call.1} parent=1 // pred_check
      _
    $region3: #{tpu_custom_call.1} parent=1 // pred_check_branch
      %9 = sbr.rel (0) target = $region5
    $region4: #{tpu_custom_call.1} parent=1 // pred_region
      %s11 = ssub.s32 64, 64
      %12 = vsyncadd [#allocation3], %s11
      %s14 = sshll.u32 [#allocation2], 4
      %s15 = int_to_ptr.vmem [resolvable:$true] %s14
      %17 = dma.hbm_to_vmem [thread:$0]  %s0, 64, %s15, [#allocation3]
    $region5: #{tpu_custom_call.1} parent=1 // pred_fallthru
      _
    // Predicated region
    $region6: #{tpu_custom_call.1} parent=1 // pred_check
      _
    $region7: #{tpu_custom_call.1} parent=1 // pred_check_branch
      %19 = sbr.rel (0) target = $region9
    $region8: #{tpu_custom_call.1} parent=1 // pred_region
      %20 = dma.done [#allocation3], 64
    $region9: #{tpu_custom_call.1} parent=1 // pred_fallthru
      _
    %v21 = vld [vmem:[#allocation2] sm:$0xf]
    %22 = vst [vmem:[#allocation5] sm:$0xf] %v21
    // Predicated region
    $region10: #{tpu_custom_call.1} parent=1 // pred_check
      _
    $region11: #{tpu_custom_call.1} parent=1 // pred_check_branch
      %24 = sbr.rel (0) target = $region13
    $region12: #{tpu_custom_call.1} parent=1 // pred_region
      %s26 = ssub.s32 64, 64
      %27 = vsyncadd [#allocation4], %s26
      %s29 = sshll.u32 [#allocation5], 4
      %s30 = int_to_ptr.vmem [resolvable:$true] %s29
      %32 = dma.vmem_to_hbm [thread:$0]  %s30, 64, %s1, [#allocation4]
    $region13: #{tpu_custom_call.1} parent=1 // pred_fallthru
      _
    // Predicated region
    $region14: #{tpu_custom_call.1} parent=1 // pred_check
      _
    $region15: #{tpu_custom_call.1} parent=1 // pred_check_branch
      %34 = sbr.rel (0) target = $region17
    $region16: #{tpu_custom_call.1} parent=1 // pred_region
      %35 = dma.done [#allocation4], 64
    $region17: #{tpu_custom_call.1} parent=1 // pred_fallthru
      _
    %36 = vsyncpa [#allocation3], 1
    %37 = vsyncpa [#allocation4], 1

</llo_original>
